<compile_context>
chip_gen: v7x
topology: tpu7x:2x2x1
jax: 0.10.0
libtpu: 0.0.40
codegen_flags: <defaults>
</compile_context>

<pallas_src>
import functools

import jax
import jax.numpy as jnp
from jax.experimental import pallas as pl
from jax.experimental.pallas import tpu as pltpu


def _double_conv_kernel(x_ref, w1_ref, b1_ref, w2_ref, b2_ref, o_ref,
                        xpad_ref, ypad_ref, *, H, W, KH, Cin, Cout, pad):
    """One batch element: (conv3x3 + bias + ReLU) x 2, fully fused in VMEM.

    x_ref:   (1, H, W*Cin)           input rows, channels flattened into lanes
    w1_ref:  (KH, Wp*Cin,  W*Cout)   banded weight matrices (one per kh)
    b1_ref:  (1, W*Cout)             bias tiled across W
    w2_ref:  (KH, Wp*Cout, W*Cout)
    b2_ref:  (1, W*Cout)
    o_ref:   (1, H, W*Cout)          lane-dense output slab
    xpad_ref: (Hp, Wp*Cin)  VMEM scratch (zero halo for conv1)
    ypad_ref: (Hp, Wp*Cout) VMEM scratch (zero halo for conv2 input)
    """
    # ---- stage 1: pad input into VMEM scratch, conv1 + bias + ReLU ----------
    xpad_ref[...] = jnp.zeros_like(xpad_ref)
    xpad_ref[pad:pad + H, pad * Cin:pad * Cin + W * Cin] = x_ref[0]

    acc1 = jnp.zeros((H, W * Cout), dtype=jnp.float32)
    for kh in range(KH):  # KW and Cin are folded into the contraction axis
        acc1 += jnp.dot(xpad_ref[kh:kh + H, :], w1_ref[kh],
                        preferred_element_type=jnp.float32)
    y1 = jnp.maximum(acc1 + b1_ref[...], 0.0)

    # ---- stage 2: intermediate stays in VMEM, conv2 + bias + ReLU -----------
    ypad_ref[...] = jnp.zeros_like(ypad_ref)
    ypad_ref[pad:pad + H, pad * Cout:pad * Cout + W * Cout] = y1.astype(
        ypad_ref.dtype)

    acc2 = jnp.zeros((H, W * Cout), dtype=jnp.float32)
    for kh in range(KH):
        acc2 += jnp.dot(ypad_ref[kh:kh + H, :], w2_ref[kh],
                        preferred_element_type=jnp.float32)
    y2 = jnp.maximum(acc2 + b2_ref[...], 0.0)

    o_ref[0] = y2.astype(o_ref.dtype)


def _make_banded_weights(w_hwio, W, pad):
    """Fold KW and Cin into the contraction axis.

    w_hwio: (KH, KW, Cin, Cout)  ->  (KH, Wp*Cin, W*Cout) with
    out[kh, (w+kw)*Cin + c, w*Cout + o] = w_hwio[kh, kw, c, o].
    """
    KH, KW, Cin, Cout = w_hwio.shape
    Wp = W + 2 * pad
    eye = jnp.eye(W, dtype=w_hwio.dtype)
    big = jnp.zeros((KH, Wp * Cin, W * Cout), dtype=w_hwio.dtype)
    for kw in range(KW):
        t = jnp.einsum("kco,wv->kwcvo", w_hwio[:, kw], eye)   # (KH,W,Cin,W,Cout)
        t = t.reshape(KH, W * Cin, W * Cout)
        big = big.at[:, kw * Cin:kw * Cin + W * Cin, :].add(t)
    return big


def double_conv_forward(x_nchw, params):
    """Forward pass of double_conv. Input/output in NCHW (PyTorch convention)."""
    w1, b1, w2, b2 = params            # w: (Cout, Cin, KH, KW) torch layout
    N, Cin, H, W = x_nchw.shape
    Cout, _, KH, KW = w1.shape
    pad = 1                            # matches nn.Conv2d(..., padding=1)
    Hp = H + 2 * pad
    Wp = W + 2 * pad

    # Layout plumbing (cheap, done once in the wrapper):
    x2d = jnp.transpose(x_nchw, (0, 2, 3, 1)).reshape(N, H, W * Cin)
    w1_hwio = jnp.transpose(w1, (2, 3, 1, 0))
    w2_hwio = jnp.transpose(w2, (2, 3, 1, 0))
    w1big = _make_banded_weights(w1_hwio, W, pad)          # (KH, Wp*Cin,  W*Cout)
    w2big = _make_banded_weights(w2_hwio, W, pad)          # (KH, Wp*Cout, W*Cout)
    b1big = jnp.tile(b1, W).reshape(1, W * Cout)
    b2big = jnp.tile(b2, W).reshape(1, W * Cout)

    kernel = functools.partial(
        _double_conv_kernel, H=H, W=W, KH=KH, Cin=Cin, Cout=Cout, pad=pad)

    out2d = pl.pallas_call(
        kernel,
        out_shape=jax.ShapeDtypeStruct((N, H, W * Cout), x_nchw.dtype),
        grid_spec=pltpu.PrefetchScalarGridSpec(
            num_scalar_prefetch=0,
            grid=(N,),
            in_specs=[
                pl.BlockSpec((1, H, W * Cin), lambda n: (n, 0, 0)),
                pl.BlockSpec((KH, Wp * Cin, W * Cout), lambda n: (0, 0, 0)),
                pl.BlockSpec((1, W * Cout), lambda n: (0, 0)),
                pl.BlockSpec((KH, Wp * Cout, W * Cout), lambda n: (0, 0, 0)),
                pl.BlockSpec((1, W * Cout), lambda n: (0, 0)),
            ],
            out_specs=pl.BlockSpec((1, H, W * Cout), lambda n: (n, 0, 0)),
            scratch_shapes=[
                pltpu.VMEM((Hp, Wp * Cin), jnp.float32),
                pltpu.VMEM((Hp, Wp * Cout), jnp.float32),
            ],
        ),
        compiler_params=pltpu.CompilerParams(
            dimension_semantics=("parallel",)),
    )(x2d, w1big, b1big, w2big, b2big)

    out = out2d.reshape(N, H, W, Cout)
    return jnp.transpose(out, (0, 3, 1, 2))                 # NHWC -> NCHW
    # TODO(synk): for large images add an H-tiled grid axis with a 1-row halo
    # so tiles fit v7x's smaller VMEM and give the second TensorCore work.


def init_double_conv_params(key, in_channels, out_channels, kernel_size):
    """Deterministic init mimicking nn.Conv2d default (kaiming-uniform style)."""
    k1, k2, k3, k4 = jax.random.split(key, 4)
    fan_in1 = in_channels * kernel_size * kernel_size
    fan_in2 = out_channels * kernel_size * kernel_size
    bound1 = 1.0 / jnp.sqrt(fan_in1)
    bound2 = 1.0 / jnp.sqrt(fan_in2)
    w1 = jax.random.uniform(k1, (out_channels, in_channels, kernel_size, kernel_size),
                            jnp.float32, -bound1, bound1)
    b1 = jax.random.uniform(k2, (out_channels,), jnp.float32, -bound1, bound1)
    w2 = jax.random.uniform(k3, (out_channels, out_channels, kernel_size, kernel_size),
                            jnp.float32, -bound2, bound2)
    b2 = jax.random.uniform(k4, (out_channels,), jnp.float32, -bound2, bound2)
    return (w1, b1, w2, b2)


def _reference_forward(x_nchw, params):
    """Pure-JAX reference (lax conv) for correctness checking."""
    w1, b1, w2, b2 = params

    def conv_relu(x, w, b):
        y = jax.lax.conv_general_dilated(
            x, w, window_strides=(1, 1), padding=((1, 1), (1, 1)),
            dimension_numbers=("NCHW", "OIHW", "NCHW"))
        y = y + b[None, :, None, None]
        return jnp.maximum(y, 0.0)

    return conv_relu(conv_relu(x_nchw, w1, b1), w2, b2)


if __name__ == "__main__":
    key = jax.random.PRNGKey(0)
    kx, kp = jax.random.split(key)

    # Small shapes consistent with the module: N=2, Cin=4, Cout=8, H=W=16,
    # kernel_size=3, stride=1 (padding=1 keeps spatial size).
    N, Cin, Cout, H, W, K = 2, 4, 8, 16, 16, 3
    x = jax.random.normal(kx, (N, Cin, H, W), dtype=jnp.float32)
    params = init_double_conv_params(kp, Cin, Cout, K)

    out = jax.block_until_ready(double_conv_forward(x, params))

    ref = _reference_forward(x, params)
    assert out.shape == (N, Cout, H, W)
    assert jnp.allclose(out, ref, atol=1e-4, rtol=1e-4), "mismatch vs lax reference"

    print("KERNEL_OK")
</pallas_src>

<mosaic_0001>
module attributes {stable_mosaic.version = 11 : i64} {
  func.func @_double_conv_kernel(%arg0: i32, %arg1: memref<1x16x64xf32, #tpu.memory_space<vmem>>, %arg2: memref<3x72x128xf32, #tpu.memory_space<vmem>>, %arg3: memref<1x128xf32, #tpu.memory_space<vmem>>, %arg4: memref<3x144x128xf32, #tpu.memory_space<vmem>>, %arg5: memref<1x128xf32, #tpu.memory_space<vmem>>, %arg6: memref<1x16x128xf32, #tpu.memory_space<vmem>>, %arg7: memref<18x72xf32, #tpu.memory_space<vmem>>, %arg8: memref<18x144xf32, #tpu.memory_space<vmem>>) attributes {dimension_semantics = [#tpu.dimension_semantics<parallel>], iteration_bounds = array<i64: 2>, scalar_prefetch = 0 : i64, scratch_operands = 2 : i64, tpu.core_type = #tpu.core_type<tc>, window_params = [{transform_indices = @transform_0, window_bounds = array<i64: 1, 16, 64>}, {pipeline_mode = #tpu.pipeline_mode<synchronous>, transform_indices = @transform_1, window_bounds = array<i64: 3, 72, 128>}, {pipeline_mode = #tpu.pipeline_mode<synchronous>, transform_indices = @transform_2, window_bounds = array<i64: 1, 128>}, {pipeline_mode = #tpu.pipeline_mode<synchronous>, transform_indices = @transform_3, window_bounds = array<i64: 3, 144, 128>}, {pipeline_mode = #tpu.pipeline_mode<synchronous>, transform_indices = @transform_4, window_bounds = array<i64: 1, 128>}, {transform_indices = @transform_5, window_bounds = array<i64: 1, 16, 128>}]} {
    %cst = arith.constant 0.000000e+00 : f32
    %0 = vector.broadcast %cst : f32 to vector<18x72xf32>
    %c0 = arith.constant 0 : index
    %c0_0 = arith.constant 0 : index
    %1 = vector.load %arg7[%c0, %c0_0] : memref<18x72xf32, #tpu.memory_space<vmem>>, vector<18x72xf32>
    tpu.vector_store %arg7[%c0, %c0_0], %0 {strides = array<i32>} : memref<18x72xf32, #tpu.memory_space<vmem>>, vector<18x72xf32>,
    %c0_1 = arith.constant 0 : index
    %c0_2 = arith.constant 0 : index
    %c0_3 = arith.constant 0 : index
    %2 = vector.load %arg1[%c0_1, %c0_2, %c0_3] : memref<1x16x64xf32, #tpu.memory_space<vmem>>, vector<1x16x64xf32>
    %3 = vector.shape_cast %2 : vector<1x16x64xf32> to vector<16x64xf32>
    %c1 = arith.constant 1 : index
    %c4 = arith.constant 4 : index
    %4 = vector.load %arg7[%c1, %c4] : memref<18x72xf32, #tpu.memory_space<vmem>>, vector<16x64xf32>
    tpu.vector_store %arg7[%c1, %c4], %3 {strides = array<i32>} : memref<18x72xf32, #tpu.memory_space<vmem>>, vector<16x64xf32>,
    %cst_4 = arith.constant 0.000000e+00 : f32
    %5 = vector.broadcast %cst_4 : f32 to vector<16x128xf32>
    %c0_5 = arith.constant 0 : index
    %c0_6 = arith.constant 0 : index
    %6 = vector.load %arg7[%c0_5, %c0_6] : memref<18x72xf32, #tpu.memory_space<vmem>>, vector<16x72xf32>
    %c0_7 = arith.constant 0 : index
    %c0_8 = arith.constant 0 : index
    %c0_9 = arith.constant 0 : index
    %7 = vector.load %arg2[%c0_7, %c0_8, %c0_9] : memref<3x72x128xf32, #tpu.memory_space<vmem>>, vector<1x72x128xf32>
    %8 = vector.shape_cast %7 : vector<1x72x128xf32> to vector<72x128xf32>
    %cst_10 = arith.constant dense<0.000000e+00> : vector<16x128xf32>
    %9 = tpu.matmul %6, %8, %cst_10 {dimension_numbers = #tpu.dot_dimension_numbers<[1], [0], [0], [1], [0, 0, 1, 1], [], []>} : vector<16x72xf32>, vector<72x128xf32>, vector<16x128xf32> -> vector<16x128xf32>
    %10 = arith.addf %5, %9 : vector<16x128xf32>
    %c1_11 = arith.constant 1 : index
    %c0_12 = arith.constant 0 : index
    %11 = vector.load %arg7[%c1_11, %c0_12] : memref<18x72xf32, #tpu.memory_space<vmem>>, vector<16x72xf32>
    %c1_13 = arith.constant 1 : index
    %c0_14 = arith.constant 0 : index
    %c0_15 = arith.constant 0 : index
    %12 = vector.load %arg2[%c1_13, %c0_14, %c0_15] : memref<3x72x128xf32, #tpu.memory_space<vmem>>, vector<1x72x128xf32>
    %13 = vector.shape_cast %12 : vector<1x72x128xf32> to vector<72x128xf32>
    %cst_16 = arith.constant dense<0.000000e+00> : vector<16x128xf32>
    %14 = tpu.matmul %11, %13, %cst_16 {dimension_numbers = #tpu.dot_dimension_numbers<[1], [0], [0], [1], [0, 0, 1, 1], [], []>} : vector<16x72xf32>, vector<72x128xf32>, vector<16x128xf32> -> vector<16x128xf32>
    %15 = arith.addf %10, %14 : vector<16x128xf32>
    %c2 = arith.constant 2 : index
    %c0_17 = arith.constant 0 : index
    %16 = vector.load %arg7[%c2, %c0_17] : memref<18x72xf32, #tpu.memory_space<vmem>>, vector<16x72xf32>
    %c2_18 = arith.constant 2 : index
    %c0_19 = arith.constant 0 : index
    %c0_20 = arith.constant 0 : index
    %17 = vector.load %arg2[%c2_18, %c0_19, %c0_20] : memref<3x72x128xf32, #tpu.memory_space<vmem>>, vector<1x72x128xf32>
    %18 = vector.shape_cast %17 : vector<1x72x128xf32> to vector<72x128xf32>
    %cst_21 = arith.constant dense<0.000000e+00> : vector<16x128xf32>
    %19 = tpu.matmul %16, %18, %cst_21 {dimension_numbers = #tpu.dot_dimension_numbers<[1], [0], [0], [1], [0, 0, 1, 1], [], []>} : vector<16x72xf32>, vector<72x128xf32>, vector<16x128xf32> -> vector<16x128xf32>
    %20 = arith.addf %15, %19 : vector<16x128xf32>
    %c0_22 = arith.constant 0 : index
    %c0_23 = arith.constant 0 : index
    %21 = vector.load %arg3[%c0_22, %c0_23] : memref<1x128xf32, #tpu.memory_space<vmem>>, vector<1x128xf32>
    %22 = vector.broadcast %21 : vector<1x128xf32> to vector<16x128xf32>
    %23 = arith.addf %20, %22 : vector<16x128xf32>
    %cst_24 = arith.constant 0.000000e+00 : f32
    %24 = vector.broadcast %cst_24 : f32 to vector<16x128xf32>
    %25 = arith.maximumf %23, %24 : vector<16x128xf32>
    %cst_25 = arith.constant 0.000000e+00 : f32
    %26 = vector.broadcast %cst_25 : f32 to vector<18x144xf32>
    %c0_26 = arith.constant 0 : index
    %c0_27 = arith.constant 0 : index
    %27 = vector.load %arg8[%c0_26, %c0_27] : memref<18x144xf32, #tpu.memory_space<vmem>>, vector<18x144xf32>
    tpu.vector_store %arg8[%c0_26, %c0_27], %26 {strides = array<i32>} : memref<18x144xf32, #tpu.memory_space<vmem>>, vector<18x144xf32>,
    %c1_28 = arith.constant 1 : index
    %c8 = arith.constant 8 : index
    %28 = vector.load %arg8[%c1_28, %c8] : memref<18x144xf32, #tpu.memory_space<vmem>>, vector<16x128xf32>
    tpu.vector_store %arg8[%c1_28, %c8], %25 {strides = array<i32>} : memref<18x144xf32, #tpu.memory_space<vmem>>, vector<16x128xf32>,
    %cst_29 = arith.constant 0.000000e+00 : f32
    %29 = vector.broadcast %cst_29 : f32 to vector<16x128xf32>
    %c0_30 = arith.constant 0 : index
    %c0_31 = arith.constant 0 : index
    %30 = vector.load %arg8[%c0_30, %c0_31] : memref<18x144xf32, #tpu.memory_space<vmem>>, vector<16x144xf32>
    %c0_32 = arith.constant 0 : index
    %c0_33 = arith.constant 0 : index
    %c0_34 = arith.constant 0 : index
    %31 = vector.load %arg4[%c0_32, %c0_33, %c0_34] : memref<3x144x128xf32, #tpu.memory_space<vmem>>, vector<1x144x128xf32>
    %32 = vector.shape_cast %31 : vector<1x144x128xf32> to vector<144x128xf32>
    %cst_35 = arith.constant dense<0.000000e+00> : vector<16x128xf32>
    %33 = tpu.matmul %30, %32, %cst_35 {dimension_numbers = #tpu.dot_dimension_numbers<[1], [0], [0], [1], [0, 0, 1, 1], [], []>} : vector<16x144xf32>, vector<144x128xf32>, vector<16x128xf32> -> vector<16x128xf32>
    %34 = arith.addf %29, %33 : vector<16x128xf32>
    %c1_36 = arith.constant 1 : index
    %c0_37 = arith.constant 0 : index
    %35 = vector.load %arg8[%c1_36, %c0_37] : memref<18x144xf32, #tpu.memory_space<vmem>>, vector<16x144xf32>
    %c1_38 = arith.constant 1 : index
    %c0_39 = arith.constant 0 : index
    %c0_40 = arith.constant 0 : index
    %36 = vector.load %arg4[%c1_38, %c0_39, %c0_40] : memref<3x144x128xf32, #tpu.memory_space<vmem>>, vector<1x144x128xf32>
    %37 = vector.shape_cast %36 : vector<1x144x128xf32> to vector<144x128xf32>
    %cst_41 = arith.constant dense<0.000000e+00> : vector<16x128xf32>
    %38 = tpu.matmul %35, %37, %cst_41 {dimension_numbers = #tpu.dot_dimension_numbers<[1], [0], [0], [1], [0, 0, 1, 1], [], []>} : vector<16x144xf32>, vector<144x128xf32>, vector<16x128xf32> -> vector<16x128xf32>
    %39 = arith.addf %34, %38 : vector<16x128xf32>
    %c2_42 = arith.constant 2 : index
    %c0_43 = arith.constant 0 : index
    %40 = vector.load %arg8[%c2_42, %c0_43] : memref<18x144xf32, #tpu.memory_space<vmem>>, vector<16x144xf32>
    %c2_44 = arith.constant 2 : index
    %c0_45 = arith.constant 0 : index
    %c0_46 = arith.constant 0 : index
    %41 = vector.load %arg4[%c2_44, %c0_45, %c0_46] : memref<3x144x128xf32, #tpu.memory_space<vmem>>, vector<1x144x128xf32>
    %42 = vector.shape_cast %41 : vector<1x144x128xf32> to vector<144x128xf32>
    %cst_47 = arith.constant dense<0.000000e+00> : vector<16x128xf32>
    %43 = tpu.matmul %40, %42, %cst_47 {dimension_numbers = #tpu.dot_dimension_numbers<[1], [0], [0], [1], [0, 0, 1, 1], [], []>} : vector<16x144xf32>, vector<144x128xf32>, vector<16x128xf32> -> vector<16x128xf32>
    %44 = arith.addf %39, %43 : vector<16x128xf32>
    %c0_48 = arith.constant 0 : index
    %c0_49 = arith.constant 0 : index
    %45 = vector.load %arg5[%c0_48, %c0_49] : memref<1x128xf32, #tpu.memory_space<vmem>>, vector<1x128xf32>
    %46 = vector.broadcast %45 : vector<1x128xf32> to vector<16x128xf32>
    %47 = arith.addf %44, %46 : vector<16x128xf32>
    %cst_50 = arith.constant 0.000000e+00 : f32
    %48 = vector.broadcast %cst_50 : f32 to vector<16x128xf32>
    %49 = arith.maximumf %47, %48 : vector<16x128xf32>
    %c0_51 = arith.constant 0 : index
    %c0_52 = arith.constant 0 : index
    %c0_53 = arith.constant 0 : index
    %50 = vector.load %arg6[%c0_51, %c0_52, %c0_53] : memref<1x16x128xf32, #tpu.memory_space<vmem>>, vector<1x16x128xf32>
    %51 = vector.shape_cast %50 : vector<1x16x128xf32> to vector<16x128xf32>
    %52 = vector.shape_cast %49 : vector<16x128xf32> to vector<1x16x128xf32>
    tpu.vector_store %arg6[%c0_51, %c0_52, %c0_53], %52 {strides = array<i32>} : memref<1x16x128xf32, #tpu.memory_space<vmem>>, vector<1x16x128xf32>,
    return
  }
  func.func @transform_0(%arg0: i32) -> (i32, i32, i32) {
    %c0_i32 = arith.constant 0 : i32
    %c0_i32_0 = arith.constant 0 : i32
    %c0_i32_1 = arith.constant 0 : i32
    return %arg0, %c0_i32, %c0_i32_0 : i32, i32, i32
  }
  func.func @transform_1(%arg0: i32) -> (i32, i32, i32) {
    %c0_i32 = arith.constant 0 : i32
    %c0_i32_0 = arith.constant 0 : i32
    %c0_i32_1 = arith.constant 0 : i32
    %c0_i32_2 = arith.constant 0 : i32
    return %c0_i32, %c0_i32_0, %c0_i32_1 : i32, i32, i32
  }
  func.func @transform_2(%arg0: i32) -> (i32, i32) {
    %c0_i32 = arith.constant 0 : i32
    %c0_i32_0 = arith.constant 0 : i32
    %c0_i32_1 = arith.constant 0 : i32
    return %c0_i32, %c0_i32_0 : i32, i32
  }
  func.func @transform_3(%arg0: i32) -> (i32, i32, i32) {
    %c0_i32 = arith.constant 0 : i32
    %c0_i32_0 = arith.constant 0 : i32
    %c0_i32_1 = arith.constant 0 : i32
    %c0_i32_2 = arith.constant 0 : i32
    return %c0_i32, %c0_i32_0, %c0_i32_1 : i32, i32, i32
  }
  func.func @transform_4(%arg0: i32) -> (i32, i32) {
    %c0_i32 = arith.constant 0 : i32
    %c0_i32_0 = arith.constant 0 : i32
    %c0_i32_1 = arith.constant 0 : i32
    return %c0_i32, %c0_i32_0 : i32, i32
  }
  func.func @transform_5(%arg0: i32) -> (i32, i32, i32) {
    %c0_i32 = arith.constant 0 : i32
    %c0_i32_0 = arith.constant 0 : i32
    %c0_i32_1 = arith.constant 0 : i32
    return %arg0, %c0_i32, %c0_i32_0 : i32, i32, i32
  }
}

</mosaic_0001>

<llo_original>
// kernel: tpu_custom_call.1
$region0: #{tpu_custom_call.1}
  #allocation0 [shape = 'u32[]', space=smem, size = 0x4, offset = 0x4, fixed_abs, tag = 'smem constant byte address 0x4 - core index']
  #allocation1 [shape = 'u32[144,128]{1,0:T(1,128)}', space=vmem, size = 0x12000, scoped, tag = 'internal scratch']
  #allocation2 [shape = 'f32[18,72]{1,0:T(8,128)}', space=vmem, size = 0x3000, scoped, tag = 'scratch operand']
  #allocation3 [shape = 'f32[18,144]{1,0:T(8,128)}', space=vmem, size = 0x6000, scoped, tag = 'scratch operand']
  %s0 = inlined_call_operand.hbm [shape: f32[2,16,64], index: 0, kind: input, shape index: {}]
  %s1 = inlined_call_operand.hbm [shape: f32[3,72,128], index: 1, kind: input, shape index: {}]
  %s2 = inlined_call_operand.vmem [shape: f32[1,128], index: 2, kind: input, shape index: {}]
  %s3 = inlined_call_operand.hbm [shape: f32[3,144,128], index: 3, kind: input, shape index: {}]
  %s4 = inlined_call_operand.vmem [shape: f32[1,128], index: 4, kind: input, shape index: {}]
  %s5 = inlined_call_operand.hbm [shape: f32[2,16,128], index: 5, kind: output, shape index: {}]
  %s6 = sld [smem:[#allocation0]]
  $region65: #{tpu_custom_call.1} parent=0
    _
  %s8 = ssub.s32 1, %s6
  %s9 = scalar_select 0, %s8, %s6
  $region1: #{tpu_custom_call.1} parent=0
    #allocation4 [shape = 'u8[16384]{0}', space=vmem, size = 0x4000, scoped, tag = 'input window, operand 0']
    #allocation5 [shape = 's32[2]{0}', space=sflag, size = 0x8, scoped, tag = 'scoped memory for tpu_custom_call.1']
    #allocation6 [shape = 's32[2]{0}', space=sflag, size = 0x8, scoped, tag = 'scoped memory for tpu_custom_call.1']
    #allocation7 [shape = 'u8[110592]{0}', space=vmem, size = 0x1b000, scoped, tag = 'input window, operand 1, single buffered']
    #allocation8 [shape = 's32[1]{0}', space=sflag, size = 0x4, scoped, tag = 'scoped memory for tpu_custom_call.1']
    #allocation9 [shape = 'u8[221184]{0}', space=vmem, size = 0x36000, scoped, tag = 'input window, operand 3, single buffered']
    #allocation10 [shape = 'u8[16384]{0}', space=vmem, size = 0x4000, scoped, tag = 'output window, operand 0']
    %10 = vsyncpa [#allocation5], 0
    %s11 = scalar_lea.sflag [#allocation5], 1
    %12 = vsyncpa %s11, 0
    %13 = vsyncpa [#allocation8], 0
    %14 = vsyncpa [#allocation6], 0
    %s15 = scalar_lea.sflag [#allocation6], 1
    %16 = vsyncpa %s15, 0
    loop: start=0, step=1, limit=4
    $region2: #{tpu_custom_call.1} parent=1 // loop_pre_header
      _
    $region3: #{tpu_custom_call.1} parent=1 // loop_header
      %s18 = sphi 0, %s22
      %p19 = scmp.ge.s32.totalorder %s18, 4
      %s28 = sphi 0, %s30
      %s31 = sphi 0, %s28
      %s32 = sphi 0, %s31
      %s48 = sphi 0, %s32
      %s52 = sphi 0, %s52
      %s54 = sphi 0, %s52
      %s55 = sphi 0, %s54
      %s69 = sphi 0, %s55
      %s73 = sphi 0, %s73
      %s75 = sphi 0, %s73
      %s76 = sphi 0, %s75
      %s90 = sphi 0, %s76
      %s94 = sphi 0, %s94
      %s96 = sphi 0, %s94
      %s97 = sphi 0, %s96
      %s111 = sphi 0, %s97
      %s115 = sphi 0, %s115
      %s117 = sphi 0, %s115
      %s118 = sphi 0, %s117
      %s132 = sphi 0, %s118
      %s138 = sphi 0, %s140
      %s141 = sphi 0, %s138
      %s142 = sphi 0, %s141
      %s158 = sphi 0, %s142
    $region4: #{tpu_custom_call.1} parent=1 // loop_header_branch
      %21 = sbr.rel (%p19) target = $region8
    $region5: #{tpu_custom_call.1} parent=1 // loop_body
      %s23 = ssub.s32 %s18, 1
      %s24 = ssub.s32 %s18, 2
      %s25 = sadd.s32 %s18, 1
      %s26 = ssub.s32 %s18, %s25
      %p27 = scmp.eq.s32.totalorder %s26, 0
      %s29 = sadd.s32 %s28, 1
      %s30 = scalar_select %p27, %s28, %s29
      %p33 = pneg %p27
      %p34 = scmp.eq.s32.totalorder %s18, 1
      %p35 = por %p33, %p34
      %p36 = scmp.ne.s32.totalorder %s28, %s31
      %p37 = scmp.eq.s32.totalorder %s18, 0
      %p38 = por %p36, %p37
      %p39 = scmp.ne.s32.totalorder %s28, %s31
      %p40 = scmp.eq.s32.totalorder %s23, 1
      %p41 = por %p39, %p40
      %p42 = scmp.ne.s32.totalorder %s31, %s32
      %p43 = scmp.eq.s32.totalorder %s23, 0
      %p44 = por %p42, %p43
      %p45 = scmp.ne.s32.totalorder %s31, %s32
      %p46 = scmp.eq.s32.totalorder %s24, 1
      %p47 = por %p45, %p46
      %p49 = scmp.ne.s32.totalorder %s32, %s48
      %p50 = scmp.eq.s32.totalorder %s24, 0
      %p51 = por %p49, %p50
      %s53 = sadd.s32 %s52, 1
      %p56 = scmp.eq.s32.totalorder %s18, 1
      %p57 = scmp.ne.s32.totalorder %s52, %s54
      %p58 = scmp.eq.s32.totalorder %s18, 0
      %p59 = por %p57, %p58
      %p60 = scmp.ne.s32.totalorder %s52, %s54
      %p61 = scmp.eq.s32.totalorder %s23, 1
      %p62 = por %p60, %p61
      %p63 = scmp.ne.s32.totalorder %s54, %s55
      %p64 = scmp.eq.s32.totalorder %s23, 0
      %p65 = por %p63, %p64
      %p66 = scmp.ne.s32.totalorder %s54, %s55
      %p67 = scmp.eq.s32.totalorder %s24, 1
      %p68 = por %p66, %p67
      %p70 = scmp.ne.s32.totalorder %s55, %s69
      %p71 = scmp.eq.s32.totalorder %s24, 0
      %p72 = por %p70, %p71
      %s74 = sadd.s32 %s73, 1
      %p77 = scmp.eq.s32.totalorder %s18, 1
      %p78 = scmp.ne.s32.totalorder %s73, %s75
      %p79 = scmp.eq.s32.totalorder %s18, 0
      %p80 = por %p78, %p79
      %p81 = scmp.ne.s32.totalorder %s73, %s75
      %p82 = scmp.eq.s32.totalorder %s23, 1
      %p83 = por %p81, %p82
      %p84 = scmp.ne.s32.totalorder %s75, %s76
      %p85 = scmp.eq.s32.totalorder %s23, 0
      %p86 = por %p84, %p85
      %p87 = scmp.ne.s32.totalorder %s75, %s76
      %p88 = scmp.eq.s32.totalorder %s24, 1
      %p89 = por %p87, %p88
      %p91 = scmp.ne.s32.totalorder %s76, %s90
      %p92 = scmp.eq.s32.totalorder %s24, 0
      %p93 = por %p91, %p92
      %s95 = sadd.s32 %s94, 1
      %p98 = scmp.eq.s32.totalorder %s18, 1
      %p99 = scmp.ne.s32.totalorder %s94, %s96
      %p100 = scmp.eq.s32.totalorder %s18, 0
      %p101 = por %p99, %p100
      %p102 = scmp.ne.s32.totalorder %s94, %s96
      %p103 = scmp.eq.s32.totalorder %s23, 1
      %p104 = por %p102, %p103
      %p105 = scmp.ne.s32.totalorder %s96, %s97
      %p106 = scmp.eq.s32.totalorder %s23, 0
      %p107 = por %p105, %p106
      %p108 = scmp.ne.s32.totalorder %s96, %s97
      %p109 = scmp.eq.s32.totalorder %s24, 1
      %p110 = por %p108, %p109
      %p112 = scmp.ne.s32.totalorder %s97, %s111
      %p113 = scmp.eq.s32.totalorder %s24, 0
      %p114 = por %p112, %p113
      %s116 = sadd.s32 %s115, 1
      %p119 = scmp.eq.s32.totalorder %s18, 1
      %p120 = scmp.ne.s32.totalorder %s115, %s117
      %p121 = scmp.eq.s32.totalorder %s18, 0
      %p122 = por %p120, %p121
      %p123 = scmp.ne.s32.totalorder %s115, %s117
      %p124 = scmp.eq.s32.totalorder %s23, 1
      %p125 = por %p123, %p124
      %p126 = scmp.ne.s32.totalorder %s117, %s118
      %p127 = scmp.eq.s32.totalorder %s23, 0
      %p128 = por %p126, %p127
      %p129 = scmp.ne.s32.totalorder %s117, %s118
      %p130 = scmp.eq.s32.totalorder %s24, 1
      %p131 = por %p129, %p130
      %p133 = scmp.ne.s32.totalorder %s118, %s132
      %p134 = scmp.eq.s32.totalorder %s24, 0
      %p135 = por %p133, %p134
      %s136 = ssub.s32 %s18, %s25
      %p137 = scmp.eq.s32.totalorder %s136, 0
      %s139 = sadd.s32 %s138, 1
      %s140 = scalar_select %p137, %s138, %s139
      %p143 = pneg %p137
      %p144 = scmp.eq.s32.totalorder %s18, 1
      %p145 = por %p143, %p144
      %p146 = scmp.ne.s32.totalorder %s138, %s141
      %p147 = scmp.eq.s32.totalorder %s18, 0
      %p148 = por %p146, %p147
      %p149 = scmp.ne.s32.totalorder %s138, %s141
      %p150 = scmp.eq.s32.totalorder %s23, 1
      %p151 = por %p149, %p150
      %p152 = scmp.ne.s32.totalorder %s141, %s142
      %p153 = scmp.eq.s32.totalorder %s23, 0
      %p154 = por %p152, %p153
      %p155 = scmp.ne.s32.totalorder %s141, %s142
      %p156 = scmp.eq.s32.totalorder %s24, 1
      %p157 = por %p155, %p156
      %p159 = scmp.ne.s32.totalorder %s142, %s158
      %p160 = scmp.eq.s32.totalorder %s24, 0
      %p161 = por %p159, %p160
      %p162 = scmp.le.s32.totalorder 1, %s18
      %p163 = scmp.lt.s32.totalorder %s18, 3
      %p164 = pnand %p162, %p163
      %p165 = pneg %p164
      // Predicated region
      $region9: #{tpu_custom_call.1} parent=5 // pred_check
        _
      $region10: #{tpu_custom_call.1} parent=5 // pred_check_branch
        %167 = sbr.rel (%p164) target = $region12
      $region11: #{tpu_custom_call.1} parent=5 // pred_region
        %s168 = ssub.s32 %s18, 1
        // Predicated region
        $region13: #{tpu_custom_call.1} parent=11 // pred_check
          %p169 = pneg %p65
        $region14: #{tpu_custom_call.1} parent=11 // pred_check_branch
          %171 = sbr.rel (%p169) target = $region16
        $region15: #{tpu_custom_call.1} parent=11 // pred_region
          %s173 = ssub.s32 3456, 3456
          %174 = vsyncadd [#allocation8], %s173
          %s175 = sshll.u32 [#allocation7], 4
          %s176 = int_to_ptr.vmem [resolvable:$true] %s175
          %181 = dma.hbm_to_vmem [thread:$0]  %s1, 3456, %s176, [#allocation8], 128, 128, 8
        $region16: #{tpu_custom_call.1} parent=11 // pred_fallthru
          _
        // Predicated region
        $region17: #{tpu_custom_call.1} parent=11 // pred_check
          %p182 = pneg %p86
        $region18: #{tpu_custom_call.1} parent=11 // pred_check_branch
          %184 = sbr.rel (%p182) target = $region20
        $region19: #{tpu_custom_call.1} parent=11 // pred_region
          _
        $region20: #{tpu_custom_call.1} parent=11 // pred_fallthru
          _
        // Predicated region
        $region21: #{tpu_custom_call.1} parent=11 // pred_check
          %p185 = pneg %p107
        $region22: #{tpu_custom_call.1} parent=11 // pred_check_branch
          %187 = sbr.rel (%p185) target = $region24
        $region23: #{tpu_custom_call.1} parent=11 // pred_region
          %s189 = ssub.s32 6912, 6912
          %190 = vsyncadd [#allocation8], %s189
          %s191 = sshll.u32 [#allocation9], 4
          %s192 = int_to_ptr.vmem [resolvable:$true] %s191
          %197 = dma.hbm_to_vmem [thread:$0]  %s3, 6912, %s192, [#allocation8], 128, 128, 8
        $region24: #{tpu_custom_call.1} parent=11 // pred_fallthru
          _
        // Predicated region
        $region25: #{tpu_custom_call.1} parent=11 // pred_check
          %p198 = pneg %p128
        $region26: #{tpu_custom_call.1} parent=11 // pred_check_branch
          %200 = sbr.rel (%p198) target = $region28
        $region27: #{tpu_custom_call.1} parent=11 // pred_region
          _
        $region28: #{tpu_custom_call.1} parent=11 // pred_fallthru
          _
      $region12: #{tpu_custom_call.1} parent=5 // pred_fallthru
        _
      %p201 = scmp.lt.s32.totalorder %s18, 2
      // Predicated region
      $region29: #{tpu_custom_call.1} parent=5 // pred_check
        %p202 = pneg %p201
      $region30: #{tpu_custom_call.1} parent=5 // pred_check_branch
        %204 = sbr.rel (%p202) target = $region32
      $region31: #{tpu_custom_call.1} parent=5 // pred_region
        // Predicated region
        $region33: #{tpu_custom_call.1} parent=31 // pred_check
          %p205 = pneg %p38
        $region34: #{tpu_custom_call.1} parent=31 // pred_check_branch
          %207 = sbr.rel (%p205) target = $region36
        $region35: #{tpu_custom_call.1} parent=31 // pred_region
          %s208 = sand.u32 %s28, 1
          %s209 = scalar_lea.sflag [#allocation5], %s208
          %s210 = sand.u32 %s28, 1
          %s211 = smul.addr %s210, 16
          %s212 = scalar_lea.vmem [#allocation4], %s211
          %s214 = ssub.s32 256, 256
          %215 = vsyncadd %s209, %s214
          %s216 = smul.addr %s18, 2
          %s217 = smul.addr %s216, 128
          %s218 = scalar_lea.hbm %s0, %s217
          %s219 = sshll.u32 %s212, 4
          %s220 = int_to_ptr.vmem [resolvable:$true] %s219
          %225 = dma.hbm_to_vmem [thread:$0]  %s218, 256, %s220, %s209, 128, 128, 8
        $region36: #{tpu_custom_call.1} parent=31 // pred_fallthru
          _
      $region32: #{tpu_custom_call.1} parent=5 // pred_fallthru
        _
      %p226 = scmp.le.s32.totalorder 1, %s18
      %p227 = scmp.lt.s32.totalorder %s18, 3
      %p228 = pnand %p226, %p227
      %p229 = pneg %p228
      // Predicated region
      $region37: #{tpu_custom_call.1} parent=5 // pred_check
        _
      $region38: #{tpu_custom_call.1} parent=5 // pred_check_branch
        %231 = sbr.rel (%p228) target = $region40
      $region39: #{tpu_custom_call.1} parent=5 // pred_region
        %s232 = ssub.s32 %s18, 1
        %s233 = sand.u32 %s31, 1
        %s234 = scalar_lea.sflag [#allocation5], %s233
        %s235 = sand.u32 %s31, 1
        %s236 = smul.addr %s235, 16
        %s237 = scalar_lea.vmem [#allocation4], %s236
        // Predicated region
        $region41: #{tpu_custom_call.1} parent=39 // pred_check
          %p238 = pneg %p44
        $region42: #{tpu_custom_call.1} parent=39 // pred_check_branch
          %240 = sbr.rel (%p238) target = $region44
        $region43: #{tpu_custom_call.1} parent=39 // pred_region
          %241 = dma.done %s234, 256
        $region44: #{tpu_custom_call.1} parent=39 // pred_fallthru
          _
        // Predicated region
        $region45: #{tpu_custom_call.1} parent=39 // pred_check
          %p242 = pneg %p65
        $region46: #{tpu_custom_call.1} parent=39 // pred_check_branch
          %244 = sbr.rel (%p242) target = $region48
        $region47: #{tpu_custom_call.1} parent=39 // pred_region
          %245 = dma.done [#allocation8], 3456
        $region48: #{tpu_custom_call.1} parent=39 // pred_fallthru
          _
        // Predicated region
        $region49: #{tpu_custom_call.1} parent=39 // pred_check
          %p246 = pneg %p107
        $region50: #{tpu_custom_call.1} parent=39 // pred_check_branch
          %248 = sbr.rel (%p246) target = $region52
        $region51: #{tpu_custom_call.1} parent=39 // pred_region
          %249 = dma.done [#allocation8], 6912
        $region52: #{tpu_custom_call.1} parent=39 // pred_fallthru
          _
        %s250 = sand.u32 %s31, 1
        %s251 = scalar_lea.sflag [#allocation5], %s250
        %s252 = sand.u32 %s31, 1
        %s253 = smul.addr %s252, 16
        %s254 = scalar_lea.vmem [#allocation4], %s253
        %p255 = pneg %p44
        %p256 = pneg %p41
        %p257 = pneg %p65
        %p258 = pneg %p62
        %p259 = pneg %p86
        %p260 = pneg %p83
        %p261 = pneg %p107
        %p262 = pneg %p104
        %p263 = pneg %p128
        %p264 = pneg %p125
        %p265 = pneg %p154
        %p266 = pneg %p151
        %s267 = sand.u32 %s141, 1
        %s268 = scalar_lea.sflag [#allocation6], %s267
        %s269 = sand.u32 %s141, 1
        %s270 = smul.addr %s269, 16
        %s271 = scalar_lea.vmem [#allocation10], %s270
        %vm272 = vcmask 588800
        %273 = vst.msk [vmem:[#allocation2] sm:$0xff] %vm272, 0.0
        %274 = vst.msk [vmem:[#allocation2 + $0x8] sm:$0xff] %vm272, 0.0
        %vm275 = vcmask 582656
        %276 = vst.msk [vmem:[#allocation2 + $0x10] sm:$0x3] %vm275, 0.0
        %v277 = vld [vmem:[%s237] sm:$0xff]
        %v278 = vld [vmem:[%s237 + $0x8] sm:$0xff]
        %281 = vrot.lane.b32.xlu0 %v277, 4
        %v282 = vpop.permute.xlu0 %281
        %283 = vrot.lane.b32.xlu0 %v278, 4
        %v284 = vpop.permute.xlu0 %283
        %vm287 = vcmask 556064
        %288 = vst.msk [vmem:[#allocation2 + $0x1] sm:$0xff] %vm287, %v282
        %289 = vst.msk [vmem:[#allocation2 + $0x9] sm:$0xff] %vm287, %v284
        %v290 = vld [vmem:[#allocation2] sm:$0xff]
        %v291 = vld [vmem:[#allocation2 + $0x8] sm:$0xff]
        %v292 = vld [vmem:[#allocation7] sm:$0xff]
        %v293 = vld [vmem:[#allocation7 + $0x8] sm:$0xff]
        %v294 = vld [vmem:[#allocation7 + $0x10] sm:$0xff]
        %v295 = vld [vmem:[#allocation7 + $0x18] sm:$0xff]
        %v296 = vld [vmem:[#allocation7 + $0x20] sm:$0xff]
        %v297 = vld [vmem:[#allocation7 + $0x28] sm:$0xff]
        %v298 = vld [vmem:[#allocation7 + $0x30] sm:$0xff]
        %v299 = vld [vmem:[#allocation7 + $0x38] sm:$0xff]
        %v300 = vld [vmem:[#allocation7 + $0x40] sm:$0xff]
        %v301 = vld [vmem:[#allocation2 + $0x1] sm:$0xff]
        %v302 = vld [vmem:[#allocation2 + $0x9] sm:$0xff]
        %s303 = scalar_lea.vmem [#allocation7], 72
        %v304 = vld [vmem:[%s303] sm:$0xff]
        %v305 = vld [vmem:[%s303 + $0x8] sm:$0xff]
        %v306 = vld [vmem:[%s303 + $0x10] sm:$0xff]
        %v307 = vld [vmem:[%s303 + $0x18] sm:$0xff]
        %v308 = vld [vmem:[%s303 + $0x20] sm:$0xff]
        %v309 = vld [vmem:[%s303 + $0x28] sm:$0xff]
        %v310 = vld [vmem:[%s303 + $0x30] sm:$0xff]
        %v311 = vld [vmem:[%s303 + $0x38] sm:$0xff]
        %v312 = vld [vmem:[%s303 + $0x40] sm:$0xff]
        %v314 = vsel %vm272, %v301, 0
        %v317 = vsel %vm272, %v302, 0
        %319 = vmatprep.subr.mxu0 0.0
        %320 = vmatpush1.msra.mxu0 %v304
        %321 = vmatprep.subr.mxu0 0.0
        %322 = vmatpush1.msra.mxu0 %v305
        %323 = vmatprep.subr.mxu0 0.0
        %324 = vmatpush1.msra.mxu0 %v306
        %325 = vmatprep.subr.mxu0 0.0
        %326 = vmatpush1.msra.mxu0 %v307
        %327 = vmatprep.subr.mxu0 0.0
        %328 = vmatpush1.msra.mxu0 %v308
        %329 = vmatprep.subr.mxu0 0.0
        %330 = vmatpush1.msra.mxu0 %v309
        %331 = vmatprep.subr.mxu0 0.0
        %332 = vmatpush1.msra.mxu0 %v310
        %333 = vmatprep.subr.mxu0 0.0
        %334 = vmatpush1.msra.mxu0 %v311
        %335 = vmatprep.subr.mxu0 0.0
        %336 = vmatpush1.msra.mxu0 %v312
        %337 = vmatprep.subr.mxu0 0.0
        %338 = vmatpush1.msra.mxu0 0.0
        %339 = vmatprep.subr.mxu0 0.0
        %340 = vmatpush1.msra.mxu0 0.0
        %341 = vmatprep.subr.mxu0 0.0
        %342 = vmatpush1.msra.mxu0 0.0
        %343 = vmatprep.subr.mxu0 0.0
        %344 = vmatpush1.msra.mxu0 0.0
        %345 = vmatprep.subr.mxu0 0.0
        %346 = vmatpush1.msra.mxu0 0.0
        %347 = vmatprep.subr.mxu0 0.0
        %348 = vmatpush1.msra.mxu0 0.0
        %349 = vmatprep.subr.mxu0 0.0
        %350 = vmatpush1.msra.mxu0 0.0
        %351 = vmatprep.subr.mxu0 0.0
        %352 = vmatpush1.msra.mxu0 0.0
        %353 = vmatprep.subr.mxu0 0.0
        %354 = vmatpush1.msra.mxu0 0.0
        %355 = vmatprep.subr.mxu0 0.0
        %356 = vmatpush1.msra.mxu0 0.0
        %357 = vmatprep.subr.mxu0 0.0
        %358 = vmatpush1.msra.mxu0 0.0
        %359 = vmatprep.subr.mxu0 0.0
        %360 = vmatpush1.msra.mxu0 0.0
        %361 = vmatprep.subr.mxu0 0.0
        %362 = vmatpush1.msra.mxu0 0.0
        %363 = vmatprep.subr.mxu0 0.0
        %364 = vmatpush1.msra.mxu0 0.0
        %365 = vmatprep.subr.mxu0 0.0
        %366 = vmatpush1.msra.mxu0 0.0
        %367 = vmatprep.subr.mxu0 0.0
        %368 = vmatpush1.msra.mxu0 0.0
        %369 = vmatprep.subr.mxu0 0.0
        %370 = vmatpush1.msra.mxu0 0.0
        %371 = vmatprep.subr.mxu0 0.0
        %372 = vmatpush1.msra.mxu0 0.0
        %373 = vmatprep.subr.mxu0 0.0
        %374 = vmatpush1.msra.mxu0 0.0
        %375 = vmatprep.subr.mxu0 0.0
        %376 = vmatpush1.msra.mxu0 0.0
        %377 = vmatprep.subr.mxu0 0.0
        %378 = vmatpush1.msra.mxu0 0.0
        %379 = vmatprep.subr.mxu0 0.0
        %380 = vmatpush1.msra.mxu0 0.0
        %381 = vmatprep.subr.mxu0 0.0
        %382 = vmatpush1.msra.mxu0 0.0
        %383 = vmatprep.mubr.f32.mxu0 0.0
        %384 = vmatmul.mubr.f32.gmra.mrb[0].mxu0 %v314
        %v385 = vpop.f32.mrb[0].mxu0
        %v386 = vadd.f32 0.0, %v385
        %v387 = vpop.f32.mrb[0].mxu0
        %388 = vmatprep.mubr.f32.mxu0 0.0
        %389 = vmatmul.mubr.f32.gmra.mrb[0].mxu0 %v317
        %v390 = vpop.f32.mrb[0].mxu0
        %v391 = vadd.f32 0.0, %v390
        %v392 = vpop.f32.mrb[0].mxu0
        %393 = vdwg.mxu0
        %v395 = vsel %vm272, %v290, 0
        %v398 = vsel %vm272, %v291, 0
        %400 = vmatprep.subr.mxu0 0.0
        %401 = vmatpush1.msra.mxu0 %v292
        %402 = vmatprep.subr.mxu0 0.0
        %403 = vmatpush1.msra.mxu0 %v293
        %404 = vmatprep.subr.mxu0 0.0
        %405 = vmatpush1.msra.mxu0 %v294
        %406 = vmatprep.subr.mxu0 0.0
        %407 = vmatpush1.msra.mxu0 %v295
        %408 = vmatprep.subr.mxu0 0.0
        %409 = vmatpush1.msra.mxu0 %v296
        %410 = vmatprep.subr.mxu0 0.0
        %411 = vmatpush1.msra.mxu0 %v297
        %412 = vmatprep.subr.mxu0 0.0
        %413 = vmatpush1.msra.mxu0 %v298
        %414 = vmatprep.subr.mxu0 0.0
        %415 = vmatpush1.msra.mxu0 %v299
        %416 = vmatprep.subr.mxu0 0.0
        %417 = vmatpush1.msra.mxu0 %v300
        %418 = vmatprep.subr.mxu0 0.0
        %419 = vmatpush1.msra.mxu0 0.0
        %420 = vmatprep.subr.mxu0 0.0
        %421 = vmatpush1.msra.mxu0 0.0
        %422 = vmatprep.subr.mxu0 0.0
        %423 = vmatpush1.msra.mxu0 0.0
        %424 = vmatprep.subr.mxu0 0.0
        %425 = vmatpush1.msra.mxu0 0.0
        %426 = vmatprep.subr.mxu0 0.0
        %427 = vmatpush1.msra.mxu0 0.0
        %428 = vmatprep.subr.mxu0 0.0
        %429 = vmatpush1.msra.mxu0 0.0
        %430 = vmatprep.subr.mxu0 0.0
        %431 = vmatpush1.msra.mxu0 0.0
        %432 = vmatprep.subr.mxu0 0.0
        %433 = vmatpush1.msra.mxu0 0.0
        %434 = vmatprep.subr.mxu0 0.0
        %435 = vmatpush1.msra.mxu0 0.0
        %436 = vmatprep.subr.mxu0 0.0
        %437 = vmatpush1.msra.mxu0 0.0
        %438 = vmatprep.subr.mxu0 0.0
        %439 = vmatpush1.msra.mxu0 0.0
        %440 = vmatprep.subr.mxu0 0.0
        %441 = vmatpush1.msra.mxu0 0.0
        %442 = vmatprep.subr.mxu0 0.0
        %443 = vmatpush1.msra.mxu0 0.0
        %444 = vmatprep.subr.mxu0 0.0
        %445 = vmatpush1.msra.mxu0 0.0
        %446 = vmatprep.subr.mxu0 0.0
        %447 = vmatpush1.msra.mxu0 0.0
        %448 = vmatprep.subr.mxu0 0.0
        %449 = vmatpush1.msra.mxu0 0.0
        %450 = vmatprep.subr.mxu0 0.0
        %451 = vmatpush1.msra.mxu0 0.0
        %452 = vmatprep.subr.mxu0 0.0
        %453 = vmatpush1.msra.mxu0 0.0
        %454 = vmatprep.subr.mxu0 0.0
        %455 = vmatpush1.msra.mxu0 0.0
        %456 = vmatprep.subr.mxu0 0.0
        %457 = vmatpush1.msra.mxu0 0.0
        %458 = vmatprep.subr.mxu0 0.0
        %459 = vmatpush1.msra.mxu0 0.0
        %460 = vmatprep.subr.mxu0 0.0
        %461 = vmatpush1.msra.mxu0 0.0
        %462 = vmatprep.subr.mxu0 0.0
        %463 = vmatpush1.msra.mxu0 0.0
        %464 = vmatprep.mubr.f32.mxu0 0.0
        %465 = vmatmul.mubr.f32.gmra.mrb[0].mxu0 %v395
        %v466 = vpop.f32.mrb[0].mxu0
        %v467 = vadd.f32 %v386, %v466
        %v468 = vpop.f32.mrb[0].mxu0
        %469 = vmatprep.mubr.f32.mxu0 0.0
        %470 = vmatmul.mubr.f32.gmra.mrb[0].mxu0 %v398
        %v471 = vpop.f32.mrb[0].mxu0
        %v472 = vadd.f32 %v391, %v471
        %v473 = vpop.f32.mrb[0].mxu0
        %474 = vdwg.mxu0
        %v475 = vld [vmem:[#allocation2 + $0x2] sm:$0xff]
        %v476 = vld [vmem:[#allocation2 + $0xa] sm:$0xff]
        %s477 = scalar_lea.vmem [#allocation7], 144
        %v478 = vld [vmem:[%s477] sm:$0xff]
        %v479 = vld [vmem:[%s477 + $0x8] sm:$0xff]
        %v480 = vld [vmem:[%s477 + $0x10] sm:$0xff]
        %v481 = vld [vmem:[%s477 + $0x18] sm:$0xff]
        %v482 = vld [vmem:[%s477 + $0x20] sm:$0xff]
        %v483 = vld [vmem:[%s477 + $0x28] sm:$0xff]
        %v484 = vld [vmem:[%s477 + $0x30] sm:$0xff]
        %v485 = vld [vmem:[%s477 + $0x38] sm:$0xff]
        %v486 = vld [vmem:[%s477 + $0x40] sm:$0xff]
        %v488 = vsel %vm272, %v475, 0
        %v491 = vsel %vm272, %v476, 0
        %493 = vmatprep.subr.mxu0 0.0
        %494 = vmatpush1.msra.mxu0 %v478
        %495 = vmatprep.subr.mxu0 0.0
        %496 = vmatpush1.msra.mxu0 %v479
        %497 = vmatprep.subr.mxu0 0.0
        %498 = vmatpush1.msra.mxu0 %v480
        %499 = vmatprep.subr.mxu0 0.0
        %500 = vmatpush1.msra.mxu0 %v481
        %501 = vmatprep.subr.mxu0 0.0
        %502 = vmatpush1.msra.mxu0 %v482
        %503 = vmatprep.subr.mxu0 0.0
        %504 = vmatpush1.msra.mxu0 %v483
        %505 = vmatprep.subr.mxu0 0.0
        %506 = vmatpush1.msra.mxu0 %v484
        %507 = vmatprep.subr.mxu0 0.0
        %508 = vmatpush1.msra.mxu0 %v485
        %509 = vmatprep.subr.mxu0 0.0
        %510 = vmatpush1.msra.mxu0 %v486
        %511 = vmatprep.subr.mxu0 0.0
        %512 = vmatpush1.msra.mxu0 0.0
        %513 = vmatprep.subr.mxu0 0.0
        %514 = vmatpush1.msra.mxu0 0.0
        %515 = vmatprep.subr.mxu0 0.0
        %516 = vmatpush1.msra.mxu0 0.0
        %517 = vmatprep.subr.mxu0 0.0
        %518 = vmatpush1.msra.mxu0 0.0
        %519 = vmatprep.subr.mxu0 0.0
        %520 = vmatpush1.msra.mxu0 0.0
        %521 = vmatprep.subr.mxu0 0.0
        %522 = vmatpush1.msra.mxu0 0.0
        %523 = vmatprep.subr.mxu0 0.0
        %524 = vmatpush1.msra.mxu0 0.0
        %525 = vmatprep.subr.mxu0 0.0
        %526 = vmatpush1.msra.mxu0 0.0
        %527 = vmatprep.subr.mxu0 0.0
        %528 = vmatpush1.msra.mxu0 0.0
        %529 = vmatprep.subr.mxu0 0.0
        %530 = vmatpush1.msra.mxu0 0.0
        %531 = vmatprep.subr.mxu0 0.0
        %532 = vmatpush1.msra.mxu0 0.0
        %533 = vmatprep.subr.mxu0 0.0
        %534 = vmatpush1.msra.mxu0 0.0
        %535 = vmatprep.subr.mxu0 0.0
        %536 = vmatpush1.msra.mxu0 0.0
        %537 = vmatprep.subr.mxu0 0.0
        %538 = vmatpush1.msra.mxu0 0.0
        %539 = vmatprep.subr.mxu0 0.0
        %540 = vmatpush1.msra.mxu0 0.0
        %541 = vmatprep.subr.mxu0 0.0
        %542 = vmatpush1.msra.mxu0 0.0
        %543 = vmatprep.subr.mxu0 0.0
        %544 = vmatpush1.msra.mxu0 0.0
        %545 = vmatprep.subr.mxu0 0.0
        %546 = vmatpush1.msra.mxu0 0.0
        %547 = vmatprep.subr.mxu0 0.0
        %548 = vmatpush1.msra.mxu0 0.0
        %549 = vmatprep.subr.mxu0 0.0
        %550 = vmatpush1.msra.mxu0 0.0
        %551 = vmatprep.subr.mxu0 0.0
        %552 = vmatpush1.msra.mxu0 0.0
        %553 = vmatprep.subr.mxu0 0.0
        %554 = vmatpush1.msra.mxu0 0.0
        %555 = vmatprep.subr.mxu0 0.0
        %556 = vmatpush1.msra.mxu0 0.0
        %557 = vmatprep.mubr.f32.mxu0 0.0
        %558 = vmatmul.mubr.f32.gmra.mrb[0].mxu0 %v488
        %v559 = vpop.f32.mrb[0].mxu0
        %v560 = vadd.f32 0.0, %v559
        %v561 = vpop.f32.mrb[0].mxu0
        %562 = vmatprep.mubr.f32.mxu0 0.0
        %563 = vmatmul.mubr.f32.gmra.mrb[0].mxu0 %v491
        %v564 = vpop.f32.mrb[0].mxu0
        %v565 = vadd.f32 0.0, %v564
        %v566 = vpop.f32.mrb[0].mxu0
        %567 = vdwg.mxu0
        %v568 = vadd.f32 %v467, %v560
        %v569 = vadd.f32 %v472, %v565
        %v570 = vld [vmem:[%s2] sm:$0x1]
        %v572 = vlaneseq
        %v573 = vshrl.u32 %v572, 7
        %v574 = vsub.s32 0, %v573
        %v575 = vrot.slane %v570, %v574
        %v577 = vadd.f32 %v568, %v575
        %v578 = vadd.f32 %v569, %v575
        %v579 = vmax.f32 %v577, 0.0
        %v580 = vmax.f32 %v578, 0.0
        %581 = vst [vmem:[#allocation3] sm:$0xff] 0.0
        %vm582 = vcmask 130048
        %583 = vst.msk [vmem:[#allocation3 + $0x8] sm:$0xff] %vm582, 0.0
        %584 = vst [vmem:[#allocation3 + $0x10] sm:$0xff] 0.0
        %585 = vst.msk [vmem:[#allocation3 + $0x18] sm:$0xff] %vm582, 0.0
        %586 = vst [vmem:[#allocation3 + $0x20] sm:$0x3] 0.0
        %vm587 = vcmask 123904
        %588 = vst.msk [vmem:[#allocation3 + $0x28] sm:$0x3] %vm587, 0.0
        %vm591 = vcmask 1040384
        %v592 = vrot.slane %v579, 7
        %v593 = vrot.slane %v580, 7
        %v594 = vsel %vm591, %v592, %v593
        %595 = vrot.lane.b32.xlu0 %v592, 8
        %v596 = vpop.permute.xlu0 %595
        %597 = vrot.lane.b32.xlu0 %v594, 8
        %v598 = vpop.permute.xlu0 %597
        %599 = vrot.lane.b32.xlu0 %v593, 8
        %v600 = vpop.permute.xlu0 %599
        %vm604 = vcmask 1047617
        %605 = vst.msk [vmem:[#allocation3] sm:$0xfe] %vm604, %v596
        %vm606 = vcmask 64513
        %607 = vst.msk [vmem:[#allocation3 + $0x8] sm:$0xfe] %vm606, %v596
        %vm608 = vcmask 1047616
        %609 = vst.msk [vmem:[#allocation3 + $0x10] sm:$0xff] %vm608, %v598
        %vm610 = vcmask 64512
        %611 = vst.msk [vmem:[#allocation3 + $0x18] sm:$0xff] %vm610, %v598
        %vm612 = vcmask 1040448
        %613 = vst.msk [vmem:[#allocation3 + $0x20] sm:$0x1] %vm612, %v600
        %vm614 = vcmask 57344
        %615 = vst.msk [vmem:[#allocation3 + $0x28] sm:$0x1] %vm614, %v600
        %v616 = vld [vmem:[#allocation3] sm:$0xff]
        %v617 = vld [vmem:[#allocation3 + $0x8] sm:$0xff]
        %v618 = vld [vmem:[#allocation3 + $0x10] sm:$0xff]
        %v619 = vld [vmem:[#allocation3 + $0x18] sm:$0xff]
        %v620 = vld [vmem:[#allocation9] sm:$0xff]
        %v621 = vld [vmem:[#allocation9 + $0x8] sm:$0xff]
        %v622 = vld [vmem:[#allocation9 + $0x10] sm:$0xff]
        %v623 = vld [vmem:[#allocation9 + $0x18] sm:$0xff]
        %v624 = vld [vmem:[#allocation9 + $0x20] sm:$0xff]
        %v625 = vld [vmem:[#allocation9 + $0x28] sm:$0xff]
        %v626 = vld [vmem:[#allocation9 + $0x30] sm:$0xff]
        %v627 = vld [vmem:[#allocation9 + $0x38] sm:$0xff]
        %v628 = vld [vmem:[#allocation9 + $0x40] sm:$0xff]
        %v629 = vld [vmem:[#allocation9 + $0x48] sm:$0xff]
        %v630 = vld [vmem:[#allocation9 + $0x50] sm:$0xff]
        %v631 = vld [vmem:[#allocation9 + $0x58] sm:$0xff]
        %v632 = vld [vmem:[#allocation9 + $0x60] sm:$0xff]
        %v633 = vld [vmem:[#allocation9 + $0x68] sm:$0xff]
        %v634 = vld [vmem:[#allocation9 + $0x70] sm:$0xff]
        %v635 = vld [vmem:[#allocation9 + $0x78] sm:$0xff]
        %v636 = vld [vmem:[#allocation9 + $0x80] sm:$0xff]
        %v637 = vld [vmem:[#allocation9 + $0x88] sm:$0xff]
        %v638 = vld [vmem:[#allocation3] sm:$0xfe]
        %v639 = vld [vmem:[#allocation3 + $0x8] sm:$0xfe]
        %v640 = vld [vmem:[#allocation3 + $0x20] sm:$0x1]
        %v641 = vld [vmem:[#allocation3 + $0x28] sm:$0x1]
        %s642 = scalar_lea.vmem [#allocation9], 144
        %v643 = vld [vmem:[%s642] sm:$0xff]
        %v644 = vld [vmem:[%s642 + $0x8] sm:$0xff]
        %v645 = vld [vmem:[%s642 + $0x10] sm:$0xff]
        %v646 = vld [vmem:[%s642 + $0x18] sm:$0xff]
        %v647 = vld [vmem:[%s642 + $0x20] sm:$0xff]
        %v648 = vld [vmem:[%s642 + $0x28] sm:$0xff]
        %v649 = vld [vmem:[%s642 + $0x30] sm:$0xff]
        %v650 = vld [vmem:[%s642 + $0x38] sm:$0xff]
        %v651 = vld [vmem:[%s642 + $0x40] sm:$0xff]
        %v652 = vld [vmem:[%s642 + $0x48] sm:$0xff]
        %v653 = vld [vmem:[%s642 + $0x50] sm:$0xff]
        %v654 = vld [vmem:[%s642 + $0x58] sm:$0xff]
        %v655 = vld [vmem:[%s642 + $0x60] sm:$0xff]
        %v656 = vld [vmem:[%s642 + $0x68] sm:$0xff]
        %v657 = vld [vmem:[%s642 + $0x70] sm:$0xff]
        %v658 = vld [vmem:[%s642 + $0x78] sm:$0xff]
        %v659 = vld [vmem:[%s642 + $0x80] sm:$0xff]
        %v660 = vld [vmem:[%s642 + $0x88] sm:$0xff]
        %vm667 = vcmask 1046528
        %v668 = vrot.slane %v638, 1
        %v669 = vrot.slane %v618, 1
        %v670 = vsel %vm667, %v668, %v669
        %v671 = vrot.slane %v639, 1
        %v672 = vrot.slane %v619, 1
        %v673 = vsel %vm667, %v671, %v672
        %v674 = vrot.slane %v640, 1
        %v675 = vsel %vm667, %v669, %v674
        %v676 = vrot.slane %v641, 1
        %v677 = vsel %vm667, %v672, %v676
        %v680 = vsel %vm582, %v673, 0
        %v682 = vsel %vm582, %v677, 0
        %684 = vmatprep.subr.mxu0 0.0
        %685 = vmatpush1.msra.mxu0 %v643
        %686 = vmatprep.subr.mxu0 0.0
        %687 = vmatpush1.msra.mxu0 %v644
        %688 = vmatprep.subr.mxu0 0.0
        %689 = vmatpush1.msra.mxu0 %v645
        %690 = vmatprep.subr.mxu0 0.0
        %691 = vmatpush1.msra.mxu0 %v646
        %692 = vmatprep.subr.mxu0 0.0
        %693 = vmatpush1.msra.mxu0 %v647
        %694 = vmatprep.subr.mxu0 0.0
        %695 = vmatpush1.msra.mxu0 %v648
        %696 = vmatprep.subr.mxu0 0.0
        %697 = vmatpush1.msra.mxu0 %v649
        %698 = vmatprep.subr.mxu0 0.0
        %699 = vmatpush1.msra.mxu0 %v650
        %700 = vmatprep.subr.mxu0 0.0
        %701 = vmatpush1.msra.mxu0 %v651
        %702 = vmatprep.subr.mxu0 0.0
        %703 = vmatpush1.msra.mxu0 %v652
        %704 = vmatprep.subr.mxu0 0.0
        %705 = vmatpush1.msra.mxu0 %v653
        %706 = vmatprep.subr.mxu0 0.0
        %707 = vmatpush1.msra.mxu0 %v654
        %708 = vmatprep.subr.mxu0 0.0
        %709 = vmatpush1.msra.mxu0 %v655
        %710 = vmatprep.subr.mxu0 0.0
        %711 = vmatpush1.msra.mxu0 %v656
        %712 = vmatprep.subr.mxu0 0.0
        %713 = vmatpush1.msra.mxu0 %v657
        %714 = vmatprep.subr.mxu0 0.0
        %715 = vmatpush1.msra.mxu0 %v658
        %716 = vmatprep.subr.mxu0 0.0
        %717 = vmatpush1.msra.mxu0 %v659
        %718 = vmatprep.subr.mxu0 0.0
        %719 = vmatpush1.msra.mxu0 %v660
        %720 = vmatprep.subr.mxu0 0.0
        %721 = vmatpush1.msra.mxu0 0.0
        %722 = vmatprep.subr.mxu0 0.0
        %723 = vmatpush1.msra.mxu0 0.0
        %724 = vmatprep.subr.mxu0 0.0
        %725 = vmatpush1.msra.mxu0 0.0
        %726 = vmatprep.subr.mxu0 0.0
        %727 = vmatpush1.msra.mxu0 0.0
        %728 = vmatprep.subr.mxu0 0.0
        %729 = vmatpush1.msra.mxu0 0.0
        %730 = vmatprep.subr.mxu0 0.0
        %731 = vmatpush1.msra.mxu0 0.0
        %732 = vmatprep.subr.mxu0 0.0
        %733 = vmatpush1.msra.mxu0 0.0
        %734 = vmatprep.subr.mxu0 0.0
        %735 = vmatpush1.msra.mxu0 0.0
        %736 = vmatprep.subr.mxu0 0.0
        %737 = vmatpush1.msra.mxu0 0.0
        %738 = vmatprep.subr.mxu0 0.0
        %739 = vmatpush1.msra.mxu0 0.0
        %740 = vmatprep.subr.mxu0 0.0
        %741 = vmatpush1.msra.mxu0 0.0
        %742 = vmatprep.subr.mxu0 0.0
        %743 = vmatpush1.msra.mxu0 0.0
        %744 = vmatprep.subr.mxu0 0.0
        %745 = vmatpush1.msra.mxu0 0.0
        %746 = vmatprep.subr.mxu0 0.0
        %747 = vmatpush1.msra.mxu0 0.0
        %748 = vmatprep.mubr.f32.mxu0 %v680
        %749 = vmatmul.mubr.f32.gmra.mrb[0].mxu0 %v670
        %v750 = vpop.f32.mrb[0].mxu0
        %v751 = vadd.f32 0.0, %v750
        %v752 = vpop.f32.mrb[0].mxu0
        %753 = vmatprep.mubr.f32.mxu0 %v682
        %754 = vmatmul.mubr.f32.gmra.mrb[0].mxu0 %v675
        %v755 = vpop.f32.mrb[0].mxu0
        %v756 = vadd.f32 0.0, %v755
        %v757 = vpop.f32.mrb[0].mxu0
        %758 = vdwg.mxu0
        %v760 = vsel %vm582, %v617, 0
        %v762 = vsel %vm582, %v619, 0
        %764 = vmatprep.subr.mxu0 0.0
        %765 = vmatpush1.msra.mxu0 %v620
        %766 = vmatprep.subr.mxu0 0.0
        %767 = vmatpush1.msra.mxu0 %v621
        %768 = vmatprep.subr.mxu0 0.0
        %769 = vmatpush1.msra.mxu0 %v622
        %770 = vmatprep.subr.mxu0 0.0
        %771 = vmatpush1.msra.mxu0 %v623
        %772 = vmatprep.subr.mxu0 0.0
        %773 = vmatpush1.msra.mxu0 %v624
        %774 = vmatprep.subr.mxu0 0.0
        %775 = vmatpush1.msra.mxu0 %v625
        %776 = vmatprep.subr.mxu0 0.0
        %777 = vmatpush1.msra.mxu0 %v626
        %778 = vmatprep.subr.mxu0 0.0
        %779 = vmatpush1.msra.mxu0 %v627
        %780 = vmatprep.subr.mxu0 0.0
        %781 = vmatpush1.msra.mxu0 %v628
        %782 = vmatprep.subr.mxu0 0.0
        %783 = vmatpush1.msra.mxu0 %v629
        %784 = vmatprep.subr.mxu0 0.0
        %785 = vmatpush1.msra.mxu0 %v630
        %786 = vmatprep.subr.mxu0 0.0
        %787 = vmatpush1.msra.mxu0 %v631
        %788 = vmatprep.subr.mxu0 0.0
        %789 = vmatpush1.msra.mxu0 %v632
        %790 = vmatprep.subr.mxu0 0.0
        %791 = vmatpush1.msra.mxu0 %v633
        %792 = vmatprep.subr.mxu0 0.0
        %793 = vmatpush1.msra.mxu0 %v634
        %794 = vmatprep.subr.mxu0 0.0
        %795 = vmatpush1.msra.mxu0 %v635
        %796 = vmatprep.subr.mxu0 0.0
        %797 = vmatpush1.msra.mxu0 %v636
        %798 = vmatprep.subr.mxu0 0.0
        %799 = vmatpush1.msra.mxu0 %v637
        %800 = vmatprep.subr.mxu0 0.0
        %801 = vmatpush1.msra.mxu0 0.0
        %802 = vmatprep.subr.mxu0 0.0
        %803 = vmatpush1.msra.mxu0 0.0
        %804 = vmatprep.subr.mxu0 0.0
        %805 = vmatpush1.msra.mxu0 0.0
        %806 = vmatprep.subr.mxu0 0.0
        %807 = vmatpush1.msra.mxu0 0.0
        %808 = vmatprep.subr.mxu0 0.0
        %809 = vmatpush1.msra.mxu0 0.0
        %810 = vmatprep.subr.mxu0 0.0
        %811 = vmatpush1.msra.mxu0 0.0
        %812 = vmatprep.subr.mxu0 0.0
        %813 = vmatpush1.msra.mxu0 0.0
        %814 = vmatprep.subr.mxu0 0.0
        %815 = vmatpush1.msra.mxu0 0.0
        %816 = vmatprep.subr.mxu0 0.0
        %817 = vmatpush1.msra.mxu0 0.0
        %818 = vmatprep.subr.mxu0 0.0
        %819 = vmatpush1.msra.mxu0 0.0
        %820 = vmatprep.subr.mxu0 0.0
        %821 = vmatpush1.msra.mxu0 0.0
        %822 = vmatprep.subr.mxu0 0.0
        %823 = vmatpush1.msra.mxu0 0.0
        %824 = vmatprep.subr.mxu0 0.0
        %825 = vmatpush1.msra.mxu0 0.0
        %826 = vmatprep.subr.mxu0 0.0
        %827 = vmatpush1.msra.mxu0 0.0
        %828 = vmatprep.mubr.f32.mxu0 %v760
        %829 = vmatmul.mubr.f32.gmra.mrb[0].mxu0 %v616
        %v830 = vpop.f32.mrb[0].mxu0
        %v831 = vadd.f32 %v751, %v830
        %v832 = vpop.f32.mrb[0].mxu0
        %833 = vmatprep.mubr.f32.mxu0 %v762
        %834 = vmatmul.mubr.f32.gmra.mrb[0].mxu0 %v618
        %v835 = vpop.f32.mrb[0].mxu0
        %v836 = vadd.f32 %v756, %v835
        %v837 = vpop.f32.mrb[0].mxu0
        %838 = vdwg.mxu0
        %v839 = vld [vmem:[#allocation3] sm:$0xfc]
        %v840 = vld [vmem:[#allocation3 + $0x8] sm:$0xfc]
        %v841 = vld [vmem:[#allocation3 + $0x20] sm:$0x3]
        %v842 = vld [vmem:[#allocation3 + $0x28] sm:$0x3]
        %s843 = scalar_lea.vmem [#allocation9], 288
        %v844 = vld [vmem:[%s843] sm:$0xff]
        %v845 = vld [vmem:[%s843 + $0x8] sm:$0xff]
        %v846 = vld [vmem:[%s843 + $0x10] sm:$0xff]
        %v847 = vld [vmem:[%s843 + $0x18] sm:$0xff]
        %v848 = vld [vmem:[%s843 + $0x20] sm:$0xff]
        %v849 = vld [vmem:[%s843 + $0x28] sm:$0xff]
        %v850 = vld [vmem:[%s843 + $0x30] sm:$0xff]
        %v851 = vld [vmem:[%s843 + $0x38] sm:$0xff]
        %v852 = vld [vmem:[%s843 + $0x40] sm:$0xff]
        %v853 = vld [vmem:[%s843 + $0x48] sm:$0xff]
        %v854 = vld [vmem:[%s843 + $0x50] sm:$0xff]
        %v855 = vld [vmem:[%s843 + $0x58] sm:$0xff]
        %v856 = vld [vmem:[%s843 + $0x60] sm:$0xff]
        %v857 = vld [vmem:[%s843 + $0x68] sm:$0xff]
        %v858 = vld [vmem:[%s843 + $0x70] sm:$0xff]
        %v859 = vld [vmem:[%s843 + $0x78] sm:$0xff]
        %v860 = vld [vmem:[%s843 + $0x80] sm:$0xff]
        %v861 = vld [vmem:[%s843 + $0x88] sm:$0xff]
        %vm866 = vcmask 1045504
        %v867 = vrot.slane %v839, 2
        %v868 = vrot.slane %v618, 2
        %v869 = vsel %vm866, %v867, %v868
        %v870 = vrot.slane %v840, 2
        %v871 = vrot.slane %v619, 2
        %v872 = vsel %vm866, %v870, %v871
        %v873 = vrot.slane %v841, 2
        %v874 = vsel %vm866, %v868, %v873
        %v875 = vrot.slane %v842, 2
        %v876 = vsel %vm866, %v871, %v875
        %v879 = vsel %vm582, %v872, 0
        %v881 = vsel %vm582, %v876, 0
        %883 = vmatprep.subr.mxu0 0.0
        %884 = vmatpush1.msra.mxu0 %v844
        %885 = vmatprep.subr.mxu0 0.0
        %886 = vmatpush1.msra.mxu0 %v845
        %887 = vmatprep.subr.mxu0 0.0
        %888 = vmatpush1.msra.mxu0 %v846
        %889 = vmatprep.subr.mxu0 0.0
        %890 = vmatpush1.msra.mxu0 %v847
        %891 = vmatprep.subr.mxu0 0.0
        %892 = vmatpush1.msra.mxu0 %v848
        %893 = vmatprep.subr.mxu0 0.0
        %894 = vmatpush1.msra.mxu0 %v849
        %895 = vmatprep.subr.mxu0 0.0
        %896 = vmatpush1.msra.mxu0 %v850
        %897 = vmatprep.subr.mxu0 0.0
        %898 = vmatpush1.msra.mxu0 %v851
        %899 = vmatprep.subr.mxu0 0.0
        %900 = vmatpush1.msra.mxu0 %v852
        %901 = vmatprep.subr.mxu0 0.0
        %902 = vmatpush1.msra.mxu0 %v853
        %903 = vmatprep.subr.mxu0 0.0
        %904 = vmatpush1.msra.mxu0 %v854
        %905 = vmatprep.subr.mxu0 0.0
        %906 = vmatpush1.msra.mxu0 %v855
        %907 = vmatprep.subr.mxu0 0.0
        %908 = vmatpush1.msra.mxu0 %v856
        %909 = vmatprep.subr.mxu0 0.0
        %910 = vmatpush1.msra.mxu0 %v857
        %911 = vmatprep.subr.mxu0 0.0
        %912 = vmatpush1.msra.mxu0 %v858
        %913 = vmatprep.subr.mxu0 0.0
        %914 = vmatpush1.msra.mxu0 %v859
        %915 = vmatprep.subr.mxu0 0.0
        %916 = vmatpush1.msra.mxu0 %v860
        %917 = vmatprep.subr.mxu0 0.0
        %918 = vmatpush1.msra.mxu0 %v861
        %919 = vmatprep.subr.mxu0 0.0
        %920 = vmatpush1.msra.mxu0 0.0
        %921 = vmatprep.subr.mxu0 0.0
        %922 = vmatpush1.msra.mxu0 0.0
        %923 = vmatprep.subr.mxu0 0.0
        %924 = vmatpush1.msra.mxu0 0.0
        %925 = vmatprep.subr.mxu0 0.0
        %926 = vmatpush1.msra.mxu0 0.0
        %927 = vmatprep.subr.mxu0 0.0
        %928 = vmatpush1.msra.mxu0 0.0
        %929 = vmatprep.subr.mxu0 0.0
        %930 = vmatpush1.msra.mxu0 0.0
        %931 = vmatprep.subr.mxu0 0.0
        %932 = vmatpush1.msra.mxu0 0.0
        %933 = vmatprep.subr.mxu0 0.0
        %934 = vmatpush1.msra.mxu0 0.0
        %935 = vmatprep.subr.mxu0 0.0
        %936 = vmatpush1.msra.mxu0 0.0
        %937 = vmatprep.subr.mxu0 0.0
        %938 = vmatpush1.msra.mxu0 0.0
        %939 = vmatprep.subr.mxu0 0.0
        %940 = vmatpush1.msra.mxu0 0.0
        %941 = vmatprep.subr.mxu0 0.0
        %942 = vmatpush1.msra.mxu0 0.0
        %943 = vmatprep.subr.mxu0 0.0
        %944 = vmatpush1.msra.mxu0 0.0
        %945 = vmatprep.subr.mxu0 0.0
        %946 = vmatpush1.msra.mxu0 0.0
        %947 = vmatprep.mubr.f32.mxu0 %v879
        %948 = vmatmul.mubr.f32.gmra.mrb[0].mxu0 %v869
        %v949 = vpop.f32.mrb[0].mxu0
        %v950 = vadd.f32 0.0, %v949
        %v951 = vpop.f32.mrb[0].mxu0
        %952 = vmatprep.mubr.f32.mxu0 %v881
        %953 = vmatmul.mubr.f32.gmra.mrb[0].mxu0 %v874
        %v954 = vpop.f32.mrb[0].mxu0
        %v955 = vadd.f32 0.0, %v954
        %v956 = vpop.f32.mrb[0].mxu0
        %957 = vdwg.mxu0
        %v958 = vadd.f32 %v831, %v950
        %v959 = vadd.f32 %v836, %v955
        %v960 = vld [vmem:[%s4] sm:$0x1]
        %v962 = vlaneseq
        %v963 = vshrl.u32 %v962, 7
        %v964 = vsub.s32 0, %v963
        %v965 = vrot.slane %v960, %v964
        %v967 = vadd.f32 %v958, %v965
        %v968 = vadd.f32 %v959, %v965
        %v969 = vmax.f32 %v967, 0.0
        %v970 = vmax.f32 %v968, 0.0
        %971 = vst [vmem:[%s271] sm:$0xff] %v969
        %972 = vst [vmem:[%s271 + $0x8] sm:$0xff] %v970
        %s973 = sand.u32 %s141, 1
        %s974 = scalar_lea.sflag [#allocation6], %s973
        %s975 = sand.u32 %s141, 1
        %s976 = smul.addr %s975, 16
        %s977 = scalar_lea.vmem [#allocation10], %s976
        // Predicated region
        $region53: #{tpu_custom_call.1} parent=39 // pred_check
          %p978 = pneg %p151
        $region54: #{tpu_custom_call.1} parent=39 // pred_check_branch
          %980 = sbr.rel (%p978) target = $region56
        $region55: #{tpu_custom_call.1} parent=39 // pred_region
          %s982 = ssub.s32 256, 256
          %983 = vsyncadd %s974, %s982
          %s984 = smul.addr %s23, 2
          %s985 = smul.addr %s984, 128
          %s986 = scalar_lea.hbm %s5, %s985
          %s987 = sshll.u32 %s977, 4
          %s988 = int_to_ptr.vmem [resolvable:$true] %s987
          %993 = dma.vmem_to_hbm [thread:$0]  %s988, 256, %s986, %s974, 128, 128, 8
        $region56: #{tpu_custom_call.1} parent=39 // pred_fallthru
          _
      $region40: #{tpu_custom_call.1} parent=5 // pred_fallthru
        _
      %p994 = scmp.le.s32.totalorder 2, %s18
      // Predicated region
      $region57: #{tpu_custom_call.1} parent=5 // pred_check
        %p995 = pneg %p994
      $region58: #{tpu_custom_call.1} parent=5 // pred_check_branch
        %997 = sbr.rel (%p995) target = $region60
      $region59: #{tpu_custom_call.1} parent=5 // pred_region
        %s998 = ssub.s32 %s18, 2
        // Predicated region
        $region61: #{tpu_custom_call.1} parent=59 // pred_check
          %p999 = pneg %p157
        $region62: #{tpu_custom_call.1} parent=59 // pred_check_branch
          %1001 = sbr.rel (%p999) target = $region64
        $region63: #{tpu_custom_call.1} parent=59 // pred_region
          %s1002 = sand.u32 %s142, 1
          %s1003 = scalar_lea.sflag [#allocation6], %s1002
          %s1004 = sand.u32 %s142, 1
          %s1005 = smul.addr %s1004, 16
          %s1006 = scalar_lea.vmem [#allocation10], %s1005
          %1007 = dma.done %s1003, 256
        $region64: #{tpu_custom_call.1} parent=59 // pred_fallthru
          _
      $region60: #{tpu_custom_call.1} parent=5 // pred_fallthru
        _
    $region6: #{tpu_custom_call.1} parent=1 // loop_footer
      %s22 = sadd.s32 1, %s18
    $region7: #{tpu_custom_call.1} parent=1 // loop_footer_branch
      %17 = sbr.rel target = $region3
    $region8: #{tpu_custom_call.1} parent=1 // loop_exit
      _
    %1008 = vsyncpa [#allocation5], 1
    %s1009 = scalar_lea.sflag [#allocation5], 1
    %1010 = vsyncpa %s1009, 1
    %1011 = vsyncpa [#allocation8], 1
    %1012 = vsyncpa [#allocation6], 1
    %s1013 = scalar_lea.sflag [#allocation6], 1
    %1014 = vsyncpa %s1013, 1

</llo_original>
